<compile_context>
chip_gen: v7x
topology: tpu7x:2x2x1
jax: 0.10.0
libtpu: 0.0.40
codegen_flags: <defaults>
</compile_context>

<pallas_src>
import jax
import jax.numpy as jnp
from jax.experimental import pallas as pl
from jax.experimental.pallas import tpu as pltpu


def _round_up(x, m):
    return ((x + m - 1) // m) * m


# ----------------------------------------------------------------------------
# Plain M-tiled linear:  y = x @ W^T + b     (W passed pre-transposed as (K, N))
# ----------------------------------------------------------------------------
def _linear_kernel(x_ref, w_ref, b_ref, o_ref):
    acc = jnp.dot(x_ref[...], w_ref[...], preferred_element_type=jnp.float32)
    o_ref[...] = (acc + b_ref[...]).astype(o_ref.dtype)


def _pallas_linear(x2d, w_t, bias, tm=512):
    """x2d: (M, K), w_t: (K, N), bias: (1, N)  -> (M, N), f32."""
    M, K = x2d.shape
    Kw, N = w_t.shape
    assert K == Kw

    # Lane-dense output: pad N up to a multiple of 128 (avoids masked vst).
    Np = _round_up(max(N, 128), 128)
    # M tile: multiple of 8, capped at `tm`; pad M so every block is full.
    TM = min(tm, _round_up(M, 8))
    Mp = _round_up(M, TM)

    if Mp != M:
        x2d = jnp.pad(x2d, ((0, Mp - M), (0, 0)))
    if Np != N:
        w_t = jnp.pad(w_t, ((0, 0), (0, Np - N)))
        bias = jnp.pad(bias, ((0, 0), (0, Np - N)))

    cost = pl.CostEstimate(
        flops=2 * Mp * K * Np,
        transcendentals=0,
        bytes_accessed=4 * (Mp * K + K * Np + Np + Mp * Np),
    )

    out = pl.pallas_call(
        _linear_kernel,
        out_shape=jax.ShapeDtypeStruct((Mp, Np), x2d.dtype),
        grid=(Mp // TM,),
        in_specs=[
            pl.BlockSpec((TM, K), lambda i: (i, 0)),   # activations: new tile per step
            pl.BlockSpec((K, Np), lambda i: (0, 0)),   # weights: resident across steps
            pl.BlockSpec((1, Np), lambda i: (0, 0)),   # bias: resident
        ],
        out_specs=pl.BlockSpec((TM, Np), lambda i: (i, 0)),
        compiler_params=pltpu.CompilerParams(
            dimension_semantics=("parallel",)),
        cost_estimate=cost,
    )(x2d, w_t, bias)
    return out[:M, :N]


# ----------------------------------------------------------------------------
# Fused rot_vel path: one kernel, per-frame weight select via scalar prefetch.
# ----------------------------------------------------------------------------
def _framewise_linear_kernel(sel_ref, x_ref, w_ref, b_ref, o_ref):
    # x_ref: (1, bs, K), w_ref: (1, K, Np), b_ref: (1, 1, Np), o_ref: (1, bs, Np)
    acc = jnp.dot(x_ref[0], w_ref[0], preferred_element_type=jnp.float32)
    o_ref[0] = (acc + b_ref[0]).astype(o_ref.dtype)


def _pallas_framewise_linear(x3d, w_stack, b_stack, latent_dim):
    """x3d: (nframes, bs, K); w_stack: (2, K, N); b_stack: (2, 1, N).

    Frame 0 uses weight 0 (poseEmbedding), frames 1.. use weight 1 (velEmbedding).
    Returns (nframes, bs, latent_dim).
    """
    nframes, bs, K = x3d.shape
    _, Kw, N = w_stack.shape
    assert K == Kw

    Np = _round_up(max(N, 128), 128)
    if Np != N:
        w_stack = jnp.pad(w_stack, ((0, 0), (0, 0), (0, Np - N)))
        b_stack = jnp.pad(b_stack, ((0, 0), (0, 0), (0, Np - N)))

    # Per-frame weight selector (SMEM scalar prefetch): [0, 1, 1, ..., 1].
    sel = jnp.concatenate(
        [jnp.zeros((1,), jnp.int32), jnp.ones((nframes - 1,), jnp.int32)]
    ) if nframes > 1 else jnp.zeros((1,), jnp.int32)

    cost = pl.CostEstimate(
        flops=2 * nframes * bs * K * Np,
        transcendentals=0,
        bytes_accessed=4 * (nframes * bs * K + 2 * K * Np + 2 * Np
                            + nframes * bs * Np),
    )

    out = pl.pallas_call(
        _framewise_linear_kernel,
        out_shape=jax.ShapeDtypeStruct((nframes, bs, Np), x3d.dtype),
        grid_spec=pltpu.PrefetchScalarGridSpec(
            num_scalar_prefetch=1,
            grid=(nframes,),
            in_specs=[
                pl.BlockSpec((1, bs, K), lambda f, sel: (f, 0, 0)),
                pl.BlockSpec((1, K, Np), lambda f, sel: (sel[f], 0, 0)),
                pl.BlockSpec((1, 1, Np), lambda f, sel: (sel[f], 0, 0)),
            ],
            out_specs=pl.BlockSpec((1, bs, Np), lambda f, sel: (f, 0, 0)),
        ),
        compiler_params=pltpu.CompilerParams(
            dimension_semantics=("parallel",)),
        cost_estimate=cost,
    )(sel, x3d, w_stack, b_stack)
    return out[:, :, :latent_dim]


# ----------------------------------------------------------------------------
# Module wrapper
# ----------------------------------------------------------------------------
class InputProcessPallas:
    """JAX/Pallas port of mydiffusion_zeggs InputProcess."""

    def __init__(self, data_rep, input_feats, latent_dim, key):
        self.data_rep = data_rep
        self.input_feats = input_feats
        self.latent_dim = latent_dim
        k1, k2, k3, k4 = jax.random.split(key, 4)
        bound = 1.0 / (input_feats ** 0.5)
        # poseEmbedding: Linear(input_feats, latent_dim); store W as (K, N) = W.T
        self.pose_w_t = jax.random.uniform(
            k1, (input_feats, latent_dim), jnp.float32, -bound, bound)
        self.pose_b = jax.random.uniform(
            k2, (1, latent_dim), jnp.float32, -bound, bound)
        if data_rep == 'rot_vel':
            self.vel_w_t = jax.random.uniform(
                k3, (input_feats, latent_dim), jnp.float32, -bound, bound)
            self.vel_b = jax.random.uniform(
                k4, (1, latent_dim), jnp.float32, -bound, bound)

    def __call__(self, x):
        # x: (bs, njoints, nfeats, nframes)
        bs, njoints, nfeats, nframes = x.shape
        K = njoints * nfeats
        # permute((3,0,1,2)).reshape(nframes, bs, K)  (XLA-side relayout)
        x3d = jnp.transpose(x, (3, 0, 1, 2)).reshape(nframes, bs, K)
        if self.data_rep in ['rot6d', 'xyz', 'hml_vec']:
            x2d = x3d.reshape(nframes * bs, K)
            y = _pallas_linear(x2d, self.pose_w_t, self.pose_b)
            return y.reshape(nframes, bs, self.latent_dim)
        elif self.data_rep == 'rot_vel':
            w_stack = jnp.stack([self.pose_w_t, self.vel_w_t], axis=0)
            b_stack = jnp.stack([self.pose_b, self.vel_b], axis=0)
            return _pallas_framewise_linear(x3d, w_stack, b_stack,
                                            self.latent_dim)
        else:
            raise ValueError


if __name__ == "__main__":
    key = jax.random.PRNGKey(0)
    kx, kp = jax.random.split(key)

    # Small shapes consistent with the module's forward:
    bs, njoints, nfeats, nframes = 2, 4, 8, 8
    input_feats = njoints * nfeats      # 32
    latent_dim = 32

    x = jax.random.normal(kx, (bs, njoints, nfeats, nframes), jnp.float32)
    x_ref = jnp.transpose(x, (3, 0, 1, 2)).reshape(nframes, bs, input_feats)

    # --- rot6d path (plain poseEmbedding, M-tiled GEMM) ---
    mod = InputProcessPallas('rot6d', input_feats, latent_dim, kp)
    out = jax.block_until_ready(mod(x))
    ref = x_ref @ mod.pose_w_t + mod.pose_b[0]
    assert out.shape == (nframes, bs, latent_dim)
    assert jnp.allclose(out, ref, atol=1e-5, rtol=1e-5)

    # --- rot_vel path (fused single kernel: pose on frame 0, vel on rest) ---
    mod_rv = InputProcessPallas('rot_vel', input_feats, latent_dim, kp)
    out_rv = jax.block_until_ready(mod_rv(x))
    ref_first = x_ref[0:1] @ mod_rv.pose_w_t + mod_rv.pose_b[0]
    ref_vel = x_ref[1:] @ mod_rv.vel_w_t + mod_rv.vel_b[0]
    ref_rv = jnp.concatenate((ref_first, ref_vel), axis=0)
    assert out_rv.shape == (nframes, bs, latent_dim)
    assert jnp.allclose(out_rv, ref_rv, atol=1e-5, rtol=1e-5)

    # --- rot_vel edge case: nframes == 1 (previously would have failed) ---
    x1 = x[..., :1]
    out1 = jax.block_until_ready(mod_rv(x1))
    ref1 = (jnp.transpose(x1, (3, 0, 1, 2)).reshape(1, bs, input_feats)
            @ mod_rv.pose_w_t + mod_rv.pose_b[0])
    assert jnp.allclose(out1, ref1, atol=1e-5, rtol=1e-5)

    print("KERNEL_OK")
</pallas_src>

<mosaic_0001>
module attributes {stable_mosaic.version = 11 : i64} {
  func.func @_linear_kernel(%arg0: i32, %arg1: memref<16x32xf32, #tpu.memory_space<vmem>>, %arg2: memref<32x128xf32, #tpu.memory_space<vmem>>, %arg3: memref<1x128xf32, #tpu.memory_space<vmem>>, %arg4: memref<16x128xf32, #tpu.memory_space<vmem>>) attributes {dimension_semantics = [#tpu.dimension_semantics<parallel>], iteration_bounds = array<i64: 1>, scalar_prefetch = 0 : i64, scratch_operands = 0 : i64, tpu.core_type = #tpu.core_type<tc>, window_params = [{transform_indices = @transform_0, window_bounds = array<i64: 16, 32>}, {pipeline_mode = #tpu.pipeline_mode<synchronous>, transform_indices = @transform_1, window_bounds = array<i64: 32, 128>}, {pipeline_mode = #tpu.pipeline_mode<synchronous>, transform_indices = @transform_2, window_bounds = array<i64: 1, 128>}, {transform_indices = @transform_3, window_bounds = array<i64: 16, 128>}]} {
    %c0 = arith.constant 0 : index
    %c0_0 = arith.constant 0 : index
    %0 = vector.load %arg1[%c0, %c0_0] : memref<16x32xf32, #tpu.memory_space<vmem>>, vector<16x32xf32>
    %c0_1 = arith.constant 0 : index
    %c0_2 = arith.constant 0 : index
    %1 = vector.load %arg2[%c0_1, %c0_2] : memref<32x128xf32, #tpu.memory_space<vmem>>, vector<32x128xf32>
    %cst = arith.constant dense<0.000000e+00> : vector<16x128xf32>
    %2 = tpu.matmul %0, %1, %cst {dimension_numbers = #tpu.dot_dimension_numbers<[1], [0], [0], [1], [0, 0, 1, 1], [], []>} : vector<16x32xf32>, vector<32x128xf32>, vector<16x128xf32> -> vector<16x128xf32>
    %c0_3 = arith.constant 0 : index
    %c0_4 = arith.constant 0 : index
    %3 = vector.load %arg3[%c0_3, %c0_4] : memref<1x128xf32, #tpu.memory_space<vmem>>, vector<1x128xf32>
    %4 = vector.broadcast %3 : vector<1x128xf32> to vector<16x128xf32>
    %5 = arith.addf %2, %4 : vector<16x128xf32>
    %c0_5 = arith.constant 0 : index
    %c0_6 = arith.constant 0 : index
    %6 = vector.load %arg4[%c0_5, %c0_6] : memref<16x128xf32, #tpu.memory_space<vmem>>, vector<16x128xf32>
    tpu.vector_store %arg4[%c0_5, %c0_6], %5 {strides = array<i32>} : memref<16x128xf32, #tpu.memory_space<vmem>>, vector<16x128xf32>,
    return
  }
  func.func @transform_0(%arg0: i32) -> (i32, i32) {
    %c0_i32 = arith.constant 0 : i32
    %c0_i32_0 = arith.constant 0 : i32
    return %arg0, %c0_i32 : i32, i32
  }
  func.func @transform_1(%arg0: i32) -> (i32, i32) {
    %c0_i32 = arith.constant 0 : i32
    %c0_i32_0 = arith.constant 0 : i32
    %c0_i32_1 = arith.constant 0 : i32
    return %c0_i32, %c0_i32_0 : i32, i32
  }
  func.func @transform_2(%arg0: i32) -> (i32, i32) {
    %c0_i32 = arith.constant 0 : i32
    %c0_i32_0 = arith.constant 0 : i32
    %c0_i32_1 = arith.constant 0 : i32
    return %c0_i32, %c0_i32_0 : i32, i32
  }
  func.func @transform_3(%arg0: i32) -> (i32, i32) {
    %c0_i32 = arith.constant 0 : i32
    %c0_i32_0 = arith.constant 0 : i32
    return %arg0, %c0_i32 : i32, i32
  }
}

</mosaic_0001>

<llo_original>
// kernel: tpu_custom_call.1
$region0: #{tpu_custom_call.1}
  #allocation0 [shape = 'u32[]', space=smem, size = 0x4, offset = 0x4, fixed_abs, tag = 'smem constant byte address 0x4 - core index']
  #allocation1 [shape = 'u32[144,128]{1,0:T(1,128)}', space=vmem, size = 0x12000, scoped, tag = 'internal scratch']
  %s0 = inlined_call_operand.hbm [shape: f32[16,32], index: 0, kind: input, shape index: {}]
  %s1 = inlined_call_operand.hbm [shape: f32[32,128], index: 1, kind: input, shape index: {}]
  %s2 = inlined_call_operand.vmem [shape: f32[1,128], index: 2, kind: input, shape index: {}]
  %s3 = inlined_call_operand.hbm [shape: f32[16,128], index: 3, kind: output, shape index: {}]
  %s4 = sld [smem:[#allocation0]]
  $region30: #{tpu_custom_call.1} parent=0
    _
  %s6 = ssub.s32 1, %s4
  %s7 = scalar_select 0, %s6, %s4
  $region1: #{tpu_custom_call.1} parent=0
    #allocation2 [shape = 'u8[8192]{0}', space=vmem, size = 0x2000, scoped, tag = 'input window, operand 0, single buffered']
    #allocation3 [shape = 's32[1]{0}', space=sflag, size = 0x4, scoped, tag = 'scoped memory for tpu_custom_call.1']
    #allocation4 [shape = 's32[1]{0}', space=sflag, size = 0x4, scoped, tag = 'scoped memory for tpu_custom_call.1']
    #allocation5 [shape = 'u8[16384]{0}', space=vmem, size = 0x4000, scoped, tag = 'input window, operand 1, single buffered']
    #allocation6 [shape = 's32[1]{0}', space=sflag, size = 0x4, scoped, tag = 'scoped memory for tpu_custom_call.1']
    #allocation7 [shape = 'u8[8192]{0}', space=vmem, size = 0x2000, scoped, tag = 'output window, operand 0, single buffered']
    %8 = vsyncpa [#allocation3], 0
    %9 = vsyncpa [#allocation6], 0
    %10 = vsyncpa [#allocation4], 0
    // Predicated region
    $region2: #{tpu_custom_call.1} parent=1 // pred_check
      _
    $region3: #{tpu_custom_call.1} parent=1 // pred_check_branch
      %12 = sbr.rel (0) target = $region5
    $region4: #{tpu_custom_call.1} parent=1 // pred_region
      %s14 = ssub.s32 256, 256
      %15 = vsyncadd [#allocation3], %s14
      %s16 = sshll.u32 [#allocation2], 4
      %s17 = int_to_ptr.vmem [resolvable:$true] %s16
      %22 = dma.hbm_to_vmem [thread:$0]  %s0, 256, %s17, [#allocation3], 128, 128, 8
    $region5: #{tpu_custom_call.1} parent=1 // pred_fallthru
      _
    // Predicated region
    $region6: #{tpu_custom_call.1} parent=1 // pred_check
      _
    $region7: #{tpu_custom_call.1} parent=1 // pred_check_branch
      %24 = sbr.rel (0) target = $region9
    $region8: #{tpu_custom_call.1} parent=1 // pred_region
      %s26 = ssub.s32 512, 512
      %27 = vsyncadd [#allocation6], %s26
      %s28 = sshll.u32 [#allocation5], 4
      %s29 = int_to_ptr.vmem [resolvable:$true] %s28
      %34 = dma.hbm_to_vmem [thread:$0]  %s1, 512, %s29, [#allocation6], 128, 128, 8
    $region9: #{tpu_custom_call.1} parent=1 // pred_fallthru
      _
    // Predicated region
    $region10: #{tpu_custom_call.1} parent=1 // pred_check
      _
    $region11: #{tpu_custom_call.1} parent=1 // pred_check_branch
      %36 = sbr.rel (0) target = $region13
    $region12: #{tpu_custom_call.1} parent=1 // pred_region
      _
    $region13: #{tpu_custom_call.1} parent=1 // pred_fallthru
      _
    // Predicated region
    $region14: #{tpu_custom_call.1} parent=1 // pred_check
      _
    $region15: #{tpu_custom_call.1} parent=1 // pred_check_branch
      %38 = sbr.rel (0) target = $region17
    $region16: #{tpu_custom_call.1} parent=1 // pred_region
      %39 = dma.done [#allocation3], 256
    $region17: #{tpu_custom_call.1} parent=1 // pred_fallthru
      _
    // Predicated region
    $region18: #{tpu_custom_call.1} parent=1 // pred_check
      _
    $region19: #{tpu_custom_call.1} parent=1 // pred_check_branch
      %41 = sbr.rel (0) target = $region21
    $region20: #{tpu_custom_call.1} parent=1 // pred_region
      %42 = dma.done [#allocation6], 512
    $region21: #{tpu_custom_call.1} parent=1 // pred_fallthru
      _
    %v43 = vld [vmem:[#allocation2] sm:$0xff]
    %v44 = vld [vmem:[#allocation2 + $0x8] sm:$0xff]
    %v45 = vld [vmem:[#allocation5] sm:$0xff]
    %v46 = vld [vmem:[#allocation5 + $0x8] sm:$0xff]
    %v47 = vld [vmem:[#allocation5 + $0x10] sm:$0xff]
    %v48 = vld [vmem:[#allocation5 + $0x18] sm:$0xff]
    %v49 = vld [vmem:[%s2] sm:$0x1]
    %v51 = vlaneseq
    %v52 = vshrl.u32 %v51, 7
    %v53 = vsub.s32 0, %v52
    %v54 = vrot.slane %v49, %v53
    %vm56 = vcmask 261120
    %v58 = vsel %vm56, %v43, 0
    %v61 = vsel %vm56, %v44, 0
    %63 = vmatprep.subr.mxu0 0.0
    %64 = vmatpush1.msra.mxu0 %v45
    %65 = vmatprep.subr.mxu0 0.0
    %66 = vmatpush1.msra.mxu0 %v46
    %67 = vmatprep.subr.mxu0 0.0
    %68 = vmatpush1.msra.mxu0 %v47
    %69 = vmatprep.subr.mxu0 0.0
    %70 = vmatpush1.msra.mxu0 %v48
    %71 = vmatprep.subr.mxu0 0.0
    %72 = vmatpush1.msra.mxu0 0.0
    %73 = vmatprep.subr.mxu0 0.0
    %74 = vmatpush1.msra.mxu0 0.0
    %75 = vmatprep.subr.mxu0 0.0
    %76 = vmatpush1.msra.mxu0 0.0
    %77 = vmatprep.subr.mxu0 0.0
    %78 = vmatpush1.msra.mxu0 0.0
    %79 = vmatprep.subr.mxu0 0.0
    %80 = vmatpush1.msra.mxu0 0.0
    %81 = vmatprep.subr.mxu0 0.0
    %82 = vmatpush1.msra.mxu0 0.0
    %83 = vmatprep.subr.mxu0 0.0
    %84 = vmatpush1.msra.mxu0 0.0
    %85 = vmatprep.subr.mxu0 0.0
    %86 = vmatpush1.msra.mxu0 0.0
    %87 = vmatprep.subr.mxu0 0.0
    %88 = vmatpush1.msra.mxu0 0.0
    %89 = vmatprep.subr.mxu0 0.0
    %90 = vmatpush1.msra.mxu0 0.0
    %91 = vmatprep.subr.mxu0 0.0
    %92 = vmatpush1.msra.mxu0 0.0
    %93 = vmatprep.subr.mxu0 0.0
    %94 = vmatpush1.msra.mxu0 0.0
    %95 = vmatprep.subr.mxu0 0.0
    %96 = vmatpush1.msra.mxu0 0.0
    %97 = vmatprep.subr.mxu0 0.0
    %98 = vmatpush1.msra.mxu0 0.0
    %99 = vmatprep.subr.mxu0 0.0
    %100 = vmatpush1.msra.mxu0 0.0
    %101 = vmatprep.subr.mxu0 0.0
    %102 = vmatpush1.msra.mxu0 0.0
    %103 = vmatprep.subr.mxu0 0.0
    %104 = vmatpush1.msra.mxu0 0.0
    %105 = vmatprep.subr.mxu0 0.0
    %106 = vmatpush1.msra.mxu0 0.0
    %107 = vmatprep.subr.mxu0 0.0
    %108 = vmatpush1.msra.mxu0 0.0
    %109 = vmatprep.subr.mxu0 0.0
    %110 = vmatpush1.msra.mxu0 0.0
    %111 = vmatprep.subr.mxu0 0.0
    %112 = vmatpush1.msra.mxu0 0.0
    %113 = vmatprep.subr.mxu0 0.0
    %114 = vmatpush1.msra.mxu0 0.0
    %115 = vmatprep.subr.mxu0 0.0
    %116 = vmatpush1.msra.mxu0 0.0
    %117 = vmatprep.subr.mxu0 0.0
    %118 = vmatpush1.msra.mxu0 0.0
    %119 = vmatprep.subr.mxu0 0.0
    %120 = vmatpush1.msra.mxu0 0.0
    %121 = vmatprep.subr.mxu0 0.0
    %122 = vmatpush1.msra.mxu0 0.0
    %123 = vmatprep.subr.mxu0 0.0
    %124 = vmatpush1.msra.mxu0 0.0
    %125 = vmatprep.subr.mxu0 0.0
    %126 = vmatpush1.msra.mxu0 0.0
    %127 = vmatprep.mubr.f32.mxu0 0.0
    %128 = vmatmul.mubr.f32.gmra.mrb[0].mxu0 %v58
    %v129 = vpop.f32.mrb[0].mxu0
    %v130 = vadd.f32 %v54, %v129
    %v131 = vpop.f32.mrb[0].mxu0
    %132 = vmatprep.mubr.f32.mxu0 0.0
    %133 = vmatmul.mubr.f32.gmra.mrb[0].mxu0 %v61
    %v134 = vpop.f32.mrb[0].mxu0
    %v135 = vadd.f32 %v54, %v134
    %v136 = vpop.f32.mrb[0].mxu0
    %137 = vdwg.mxu0
    %138 = vst [vmem:[#allocation7] sm:$0xff] %v130
    %139 = vst [vmem:[#allocation7 + $0x8] sm:$0xff] %v135
    // Predicated region
    $region22: #{tpu_custom_call.1} parent=1 // pred_check
      _
    $region23: #{tpu_custom_call.1} parent=1 // pred_check_branch
      %141 = sbr.rel (0) target = $region25
    $region24: #{tpu_custom_call.1} parent=1 // pred_region
      %s143 = ssub.s32 256, 256
      %144 = vsyncadd [#allocation4], %s143
      %s145 = sshll.u32 [#allocation7], 4
      %s146 = int_to_ptr.vmem [resolvable:$true] %s145
      %151 = dma.vmem_to_hbm [thread:$0]  %s146, 256, %s3, [#allocation4], 128, 128, 8
    $region25: #{tpu_custom_call.1} parent=1 // pred_fallthru
      _
    // Predicated region
    $region26: #{tpu_custom_call.1} parent=1 // pred_check
      _
    $region27: #{tpu_custom_call.1} parent=1 // pred_check_branch
      %153 = sbr.rel (0) target = $region29
    $region28: #{tpu_custom_call.1} parent=1 // pred_region
      %154 = dma.done [#allocation4], 256
    $region29: #{tpu_custom_call.1} parent=1 // pred_fallthru
      _
    %155 = vsyncpa [#allocation3], 1
    %156 = vsyncpa [#allocation6], 1
    %157 = vsyncpa [#allocation4], 1

</llo_original>
